<compile_context>
chip_gen: v6e
topology: v6e:2x2x1
jax: 0.10.0
libtpu: 0.0.40
codegen_flags: <defaults>
</compile_context>

<pallas_src>
import functools

import numpy as np
import jax
import jax.numpy as jnp
from jax import lax
from jax.experimental import pallas as pl
from jax.experimental.pallas import tpu as pltpu

EPS = 1e-5


# ----------------------------------------------------------------------------
# host-side glue: build mixing matrices (plain numpy, deterministic)
# ----------------------------------------------------------------------------
def upsample_matrix(n_in, n_out):
    """PyTorch bilinear (align_corners=False) 1-D upsample as (n_in, n_out) matrix."""
    U = np.zeros((n_in, n_out), np.float64)
    scale = n_in / n_out
    for j in range(n_out):
        src = max((j + 0.5) * scale - 0.5, 0.0)
        i0 = min(int(np.floor(src)), n_in - 1)
        i1 = min(i0 + 1, n_in - 1)
        frac = src - i0
        U[i0, j] += 1.0 - frac
        U[i1, j] += frac
    return U


def conv_mix_matrix(Wt, w):
    """ConvTranspose2d(kernel=(1,k), stride=1, padding=(0,(k-1)//2)) on width w as a
    (Cin*w, Cout*w) column-mixing matrix, column order (c, w)."""
    Cin, Cout, _, k = Wt.shape
    pad = (k - 1) // 2
    M = np.zeros((Cin * w, Cout * w), np.float64)
    for ci in range(Cin):
        for wi in range(w):
            for co in range(Cout):
                for wo in range(w):
                    t = wo - wi + pad
                    if 0 <= t < k:
                        M[ci * w + wi, co * w + wo] = float(Wt[ci, co, 0, t])
    return M


def build_decoder_params(key, latent_dim, P, W, f1=8, f2=16, f3=32, f4=64):
    w1 = int(np.floor(W / 16))
    w2 = int(np.floor(W / 8))
    w3 = int(np.floor(W / 4))
    w4 = int(np.floor(W / 2))
    C1, C2, C3 = f3, f2, f1                       # channels after stages 1, 2, 3
    K1, K2, K3, K4 = C1 * w1, C2 * w2, C3 * w3, w4
    W_pad = ((W + 127) // 128) * 128              # lane-dense output width

    ks = list(jax.random.split(key, 24))

    def rnd(shape, scale=0.1):
        k = ks.pop(0)
        return np.asarray(jax.random.normal(k, shape, dtype=jnp.float32)) * np.float32(scale)

    # raw parameters (shapes match the PyTorch module)
    fc_w = rnd((latent_dim, f4))                  # Linear stored as (in, out)
    fc_b = rnd((1, f4))
    Wd1 = rnd((f4, f3, P, w1))                    # ConvTranspose2d(f4, f3, (P, w1))
    bd1 = rnd((f3,))
    W2 = [rnd((f3, f2, 1, k)) for k in (3, 5, 7)]
    b2 = [rnd((f2,)) for _ in range(3)]
    W3 = [rnd((f2, f1, 1, k)) for k in (3, 5, 7)]
    b3 = [rnd((f1,)) for _ in range(3)]
    W4 = [rnd((f1, 1, 1, k)) for k in (3, 5, 7)]
    b4 = [rnd((1,)) for _ in range(3)]
    wlast = rnd((1, 3, 1, 1))                     # convlast 1x1, 3 -> 1
    blast = rnd((1,))
    # BatchNorm2d default affine init: gamma = 1, beta = 0 (batch stats, biased variance)

    U1 = upsample_matrix(w1, w2)
    U2 = upsample_matrix(w2, w3)
    U3 = upsample_matrix(w3, w4)
    U4 = upsample_matrix(w4, W)

    # stage 1: deconv1_1 on a 1x1 input -> dense (f4, P*C1*w1), column order (p, c, w)
    W1flat = Wd1.transpose(0, 2, 1, 3).reshape(f4, P * K1).astype(np.float64)
    b1c = np.tile(np.repeat(np.asarray(bd1, np.float64), w1), P)[None, :]

    def fused(Uprev, Cin, Wt, w):
        # (upsample_prev then deconv(1,k)) as one (Cin*w_prev, Cout*w) column-mix matrix
        return np.kron(np.eye(Cin), Uprev) @ conv_mix_matrix(Wt, w)

    A2 = np.stack([fused(U1, C1, W2[j], w2) for j in range(3)])      # (3, K1, K2)
    b2c = np.stack([np.repeat(np.asarray(b2[j], np.float64), w2)[None, :] for j in range(3)])
    A3 = np.stack([fused(U2, C2, W3[j], w3) for j in range(3)])      # (3, K2, K3)
    b3c = np.stack([np.repeat(np.asarray(b3[j], np.float64), w3)[None, :] for j in range(3)])
    A4 = np.stack([fused(U3, C3, W4[j], w4) for j in range(3)])      # (3, K3, K4)
    b4c = np.stack([np.repeat(np.asarray(b4[j], np.float64), w4)[None, :] for j in range(3)])

    # final bilinear upsample, zero-padded to a multiple-of-128 output width (lane-dense store)
    U4p = np.zeros((K4, W_pad), np.float64)
    U4p[:, :W] = U4

    # BN segment-mean / broadcast-back matrices (skinny: K x C and C x K, no K x K kron)
    def gsum(C, w):
        return np.kron(np.eye(C), np.ones((w, 1)) / float(w))

    def gbc(C, w):
        return np.kron(np.eye(C), np.ones((1, w)))

    gs1, gb1 = gsum(C1, w1), gbc(C1, w1)
    gs2, gb2 = gsum(C2, w2), gbc(C2, w2)
    gs3, gb3 = gsum(C3, w3), gbc(C3, w3)

    g1, be1 = np.ones((1, C1)), np.zeros((1, C1))
    g2, be2 = np.ones((1, 1, C2)), np.zeros((1, 1, C2))
    g3, be3 = np.ones((1, 1, C3)), np.zeros((1, 1, C3))

    # SMEM scalars: [bn4 gamma, bn4 beta, convlast w_branch0..2, convlast bias]
    scal = np.array([1.0, 0.0,
                     float(wlast[0, 0, 0, 0]), float(wlast[0, 1, 0, 0]),
                     float(wlast[0, 2, 0, 0]), float(blast[0])], np.float32)

    params = [fc_w, fc_b, W1flat, b1c,
              gs1, gb1, g1, be1,
              A2, b2c, gs2, gb2, g2, be2,
              A3, b3c, gs3, gb3, g3, be3,
              A4, b4c, U4p, scal]
    return [jnp.asarray(p, jnp.float32) for p in params]


# ----------------------------------------------------------------------------
# Pallas kernels
# ----------------------------------------------------------------------------
def _bn_relu_2d(f, gsum, gbc, gamma, beta):
    """BatchNorm (batch stats, biased var) + ReLU on a (R, K) tile, columns grouped (c, w)."""
    f32 = jnp.float32
    m = jnp.mean(f, axis=0, keepdims=True)                     # (1, K)  row (batch*P) mean
    m2 = jnp.mean(f * f, axis=0, keepdims=True)
    mean_c = jnp.dot(m, gsum, preferred_element_type=f32)      # (1, C)  per-channel mean
    msq_c = jnp.dot(m2, gsum, preferred_element_type=f32)
    var_c = msq_c - mean_c * mean_c                            # biased variance (PyTorch BN)
    scale_c = gamma * lax.rsqrt(var_c + EPS)
    shift_c = beta - mean_c * scale_c
    scale = jnp.dot(scale_c, gbc, preferred_element_type=f32)  # (1, K)  broadcast back over w
    shift = jnp.dot(shift_c, gbc, preferred_element_type=f32)
    return jnp.maximum(f * scale + shift, 0.0)


def _bn_relu_batched(f, gsum, gbc, gamma, beta):
    """Same as above for the branch-stacked (3, R, K) tile (independent stats per branch)."""
    f32 = jnp.float32
    J = f.shape[0]
    dn = (((2,), (1,)), ((0,), (0,)))
    gsum_b = jnp.broadcast_to(gsum[None], (J,) + gsum.shape)
    gbc_b = jnp.broadcast_to(gbc[None], (J,) + gbc.shape)
    m = jnp.mean(f, axis=1, keepdims=True)                     # (3, 1, K)
    m2 = jnp.mean(f * f, axis=1, keepdims=True)
    mean_c = lax.dot_general(m, gsum_b, dn, preferred_element_type=f32)    # (3, 1, C)
    msq_c = lax.dot_general(m2, gsum_b, dn, preferred_element_type=f32)
    var_c = msq_c - mean_c * mean_c
    scale_c = gamma * lax.rsqrt(var_c + EPS)
    shift_c = beta - mean_c * scale_c
    scale = lax.dot_general(scale_c, gbc_b, dn, preferred_element_type=f32)  # (3, 1, K)
    shift = lax.dot_general(shift_c, gbc_b, dn, preferred_element_type=f32)
    return jnp.maximum(f * scale + shift, 0.0)


def decoder_stage1_kernel(x_ref, fcw_ref, fcb_ref, w1_ref, b1_ref, out_ref):
    """fc + ReLU + deconv1_1 (1x1 input -> full (P, w1) map).  Output columns (p, c, w).
    The PyTorch forward recomputes this identical stack for all three branches; done once."""
    f32 = jnp.float32
    h = jnp.maximum(
        jnp.dot(x_ref[...], fcw_ref[...], preferred_element_type=f32) + fcb_ref[...], 0.0)
    out_ref[...] = jnp.dot(h, w1_ref[...], preferred_element_type=f32) + b1_ref[...]


def decoder_main_kernel(s1_ref,
                        gs1_ref, gb1_ref, g1_ref, be1_ref,
                        A2_ref, b2_ref, gs2_ref, gb2_ref, g2_ref, be2_ref,
                        A3_ref, b3_ref, gs3_ref, gb3_ref, g3_ref, be3_ref,
                        A4_ref, b4_ref,
                        U4_ref, scal_ref,
                        out_ref, *, use_sigmoid):
    f32 = jnp.float32
    dn = (((2,), (1,)), ((0,), (0,)))

    # bn1 + ReLU on the shared stage-1 activation, rows = B*P, columns = (c1, w1)
    f = _bn_relu_2d(s1_ref[...], gs1_ref[...], gb1_ref[...], g1_ref[...], be1_ref[...])

    # stage 2: branch-stacked batched matmul with the fused (up1 -> deconv2_j) matrices
    fb = jnp.broadcast_to(f[None], (3,) + f.shape)                        # (3, R, K1)
    f2 = lax.dot_general(fb, A2_ref[...], dn, preferred_element_type=f32) + b2_ref[...]
    f2 = _bn_relu_batched(f2, gs2_ref[...], gb2_ref[...], g2_ref[...], be2_ref[...])

    # stage 3: fused (up2 -> deconv3_j)
    f3 = lax.dot_general(f2, A3_ref[...], dn, preferred_element_type=f32) + b3_ref[...]
    f3 = _bn_relu_batched(f3, gs3_ref[...], gb3_ref[...], g3_ref[...], be3_ref[...])

    # stage 4: fused (up3 -> deconv4_j) -> single output channel, width w4
    f4 = lax.dot_general(f3, A4_ref[...], dn, preferred_element_type=f32) + b4_ref[...]

    # bn4 (C=1): per-branch stats over all (rows, width) -- pure VPU reduces, no matmul
    m = jnp.mean(jnp.mean(f4, axis=2, keepdims=True), axis=1, keepdims=True)       # (3,1,1)
    m2 = jnp.mean(jnp.mean(f4 * f4, axis=2, keepdims=True), axis=1, keepdims=True)
    var = m2 - m * m
    g4 = scal_ref[0]
    be4 = scal_ref[1]
    scale4 = g4 * lax.rsqrt(var + EPS)
    shift4 = be4 - m * scale4
    y4 = jnp.maximum(f4 * scale4 + shift4, 0.0)                                    # (3, R, w4)

    # convlast (1x1 over 3 branches, scalar weights from SMEM) applied before the shared up4
    comb = y4[0] * scal_ref[2] + y4[1] * scal_ref[3] + y4[2] * scal_ref[4]          # (R, w4)
    o = jnp.dot(comb, U4_ref[...], preferred_element_type=f32) + scal_ref[5]        # (R, W_pad)
    if use_sigmoid:     # scale_flag == 0
        o = pl.reciprocal(1.0 + jnp.exp(-o), approx=True)   # EUP path, no VALU divide
    out_ref[...] = o


# ----------------------------------------------------------------------------
# wrapper
# ----------------------------------------------------------------------------
def decoder_forward(x, params, P, W, use_sigmoid=True):
    (fcw, fcb, W1flat, b1c,
     gs1, gb1, g1, be1,
     A2, b2, gs2, gb2, g2, be2,
     A3, b3, gs3, gb3, g3, be3,
     A4, b4, U4p, scal) = params

    B = x.shape[0]
    K1 = W1flat.shape[1] // P
    W_pad = U4p.shape[1]

    vm = pl.BlockSpec(memory_space=pltpu.MemorySpace.VMEM)
    sm = pl.BlockSpec(memory_space=pltpu.MemorySpace.SMEM)
    cparams = pltpu.CompilerParams(vmem_limit_bytes=32 * 1024 * 1024)

    # call 1: fc + deconv1_1, output (B, P*K1) with columns ordered (p, c, w)
    s1 = pl.pallas_call(
        decoder_stage1_kernel,
        out_shape=jax.ShapeDtypeStruct((B, P * K1), jnp.float32),
        in_specs=[vm] * 5,
        out_specs=vm,
        compiler_params=cparams,
    )(x, fcw, fcb, W1flat, b1c)

    # layout change (B, P*K1) -> (B*P, K1) done in XLA between the calls (free),
    # so the kernel never needs a cross-tile in-register reshape.
    s1 = s1.reshape(B * P, K1)

    # call 2: bn1 .. convlast .. sigmoid with rows = B*P (big MXU M-dim), branches stacked.
    # NOTE: no batch grid on purpose -- BatchNorm(track_running_stats=False) uses full-batch
    # statistics, so tiling the batch across grid steps would change the module's semantics.
    out = pl.pallas_call(
        functools.partial(decoder_main_kernel, use_sigmoid=use_sigmoid),
        out_shape=jax.ShapeDtypeStruct((B * P, W_pad), jnp.float32),
        in_specs=[vm] * 20 + [sm],
        out_specs=vm,
        compiler_params=cparams,
    )(s1,
      gs1, gb1, g1, be1,
      A2, b2, gs2, gb2, g2, be2,
      A3, b3, gs3, gb3, g3, be3,
      A4, b4, U4p, scal)

    # drop lane padding; final torch.reshape(..., (-1, num_param, window_size))
    return out[:, :W].reshape(B, P, W)


# ----------------------------------------------------------------------------
if __name__ == "__main__":
    B, latent_dim, num_param, window_size = 2, 32, 4, 16
    scale_flag = 0   # 0 -> Sigmoid output activation

    key = jax.random.PRNGKey(0)
    kx, kp = jax.random.split(key)
    x = jax.random.normal(kx, (B, latent_dim), dtype=jnp.float32)
    params = build_decoder_params(kp, latent_dim, num_param, window_size)

    out = decoder_forward(x, params, num_param, window_size, use_sigmoid=(scale_flag == 0))
    out = jax.block_until_ready(out)

    assert out.shape == (B, num_param, window_size), out.shape
    assert bool(jnp.all(jnp.isfinite(out)))
    print("KERNEL_OK")
</pallas_src>

<mosaic_0001>
module attributes {stable_mosaic.version = 11 : i64} {
  func.func @decoder_stage1_kernel(%arg0: memref<2x32xf32, #tpu.memory_space<vmem>>, %arg1: memref<32x64xf32, #tpu.memory_space<vmem>>, %arg2: memref<1x64xf32, #tpu.memory_space<vmem>>, %arg3: memref<64x128xf32, #tpu.memory_space<vmem>>, %arg4: memref<1x128xf32, #tpu.memory_space<vmem>>, %arg5: memref<2x128xf32, #tpu.memory_space<vmem>>) attributes {dimension_semantics = [], scalar_prefetch = 0 : i64, scratch_operands = 0 : i64, tpu.core_type = #tpu.core_type<tc>} {
    %c0 = arith.constant 0 : index
    %c0_0 = arith.constant 0 : index
    %0 = vector.load %arg0[%c0, %c0_0] : memref<2x32xf32, #tpu.memory_space<vmem>>, vector<2x32xf32>
    %c0_1 = arith.constant 0 : index
    %c0_2 = arith.constant 0 : index
    %1 = vector.load %arg1[%c0_1, %c0_2] : memref<32x64xf32, #tpu.memory_space<vmem>>, vector<32x64xf32>
    %cst = arith.constant dense<0.000000e+00> : vector<2x64xf32>
    %2 = tpu.matmul %0, %1, %cst {dimension_numbers = #tpu.dot_dimension_numbers<[1], [0], [0], [1], [0, 0, 1, 1], [], []>} : vector<2x32xf32>, vector<32x64xf32>, vector<2x64xf32> -> vector<2x64xf32>
    %c0_3 = arith.constant 0 : index
    %c0_4 = arith.constant 0 : index
    %3 = vector.load %arg2[%c0_3, %c0_4] : memref<1x64xf32, #tpu.memory_space<vmem>>, vector<1x64xf32>
    %4 = vector.broadcast %3 : vector<1x64xf32> to vector<2x64xf32>
    %5 = arith.addf %2, %4 : vector<2x64xf32>
    %cst_5 = arith.constant 0.000000e+00 : f32
    %6 = vector.broadcast %cst_5 : f32 to vector<2x64xf32>
    %7 = arith.maximumf %5, %6 : vector<2x64xf32>
    %c0_6 = arith.constant 0 : index
    %c0_7 = arith.constant 0 : index
    %8 = vector.load %arg3[%c0_6, %c0_7] : memref<64x128xf32, #tpu.memory_space<vmem>>, vector<64x128xf32>
    %cst_8 = arith.constant dense<0.000000e+00> : vector<2x128xf32>
    %9 = tpu.matmul %7, %8, %cst_8 {dimension_numbers = #tpu.dot_dimension_numbers<[1], [0], [0], [1], [0, 0, 1, 1], [], []>} : vector<2x64xf32>, vector<64x128xf32>, vector<2x128xf32> -> vector<2x128xf32>
    %c0_9 = arith.constant 0 : index
    %c0_10 = arith.constant 0 : index
    %10 = vector.load %arg4[%c0_9, %c0_10] : memref<1x128xf32, #tpu.memory_space<vmem>>, vector<1x128xf32>
    %11 = vector.broadcast %10 : vector<1x128xf32> to vector<2x128xf32>
    %12 = arith.addf %9, %11 : vector<2x128xf32>
    %c0_11 = arith.constant 0 : index
    %c0_12 = arith.constant 0 : index
    %13 = vector.load %arg5[%c0_11, %c0_12] : memref<2x128xf32, #tpu.memory_space<vmem>>, vector<2x128xf32>
    tpu.vector_store %arg5[%c0_11, %c0_12], %12 {strides = array<i32>} : memref<2x128xf32, #tpu.memory_space<vmem>>, vector<2x128xf32>,
    return
  }
}

</mosaic_0001>

<llo_original>
// kernel: tpu_custom_call.1
$region0: #{tpu_custom_call.1}
  #allocation0 [shape = 'u32[]', space=smem, size = 0x4, offset = 0x4, fixed_abs, tag = 'smem constant byte address 0x4 - core index']
  #allocation1 [shape = 'u32[144,128]{1,0:T(1,128)}', space=vmem, size = 0x12000, scoped, tag = 'internal scratch']
  %s0 = inlined_call_operand.hbm [shape: f32[2,32], index: 0, kind: input, shape index: {}]
  %s1 = inlined_call_operand.hbm [shape: f32[32,64], index: 1, kind: input, shape index: {}]
  %s2 = inlined_call_operand.vmem [shape: f32[1,64], index: 2, kind: input, shape index: {}]
  %s3 = inlined_call_operand.hbm [shape: f32[64,128], index: 3, kind: input, shape index: {}]
  %s4 = inlined_call_operand.vmem [shape: f32[1,128], index: 4, kind: input, shape index: {}]
  %s5 = inlined_call_operand.hbm [shape: f32[2,128], index: 5, kind: output, shape index: {}]
  %s6 = sld [smem:[#allocation0]]
  $region42: #{tpu_custom_call.1} parent=0
    _
  %s8 = ssub.s32 1, %s6
  %s9 = scalar_select 0, %s8, %s6
  $region1: #{tpu_custom_call.1} parent=0
    #allocation2 [shape = 'u8[1024]{0}', space=vmem, size = 0x400, scoped, tag = 'input window, operand 0, single buffered']
    #allocation3 [shape = 's32[1]{0}', space=sflag, size = 0x4, scoped, tag = 'scoped memory for tpu_custom_call.1']
    #allocation4 [shape = 's32[1]{0}', space=sflag, size = 0x4, scoped, tag = 'scoped memory for tpu_custom_call.1']
    #allocation5 [shape = 'u8[16384]{0}', space=vmem, size = 0x4000, scoped, tag = 'input window, operand 1, single buffered']
    #allocation6 [shape = 's32[1]{0}', space=sflag, size = 0x4, scoped, tag = 'scoped memory for tpu_custom_call.1']
    #allocation7 [shape = 'u8[32768]{0}', space=vmem, size = 0x8000, scoped, tag = 'input window, operand 3, single buffered']
    #allocation8 [shape = 'u8[1024]{0}', space=vmem, size = 0x400, scoped, tag = 'output window, operand 0, single buffered']
    %10 = vsyncpa [#allocation3], 0
    %11 = vsyncpa [#allocation6], 0
    %12 = vsyncpa [#allocation4], 0
    // Predicated region
    $region2: #{tpu_custom_call.1} parent=1 // pred_check
      _
    $region3: #{tpu_custom_call.1} parent=1 // pred_check_branch
      %14 = sbr.rel (0) target = $region5
    $region4: #{tpu_custom_call.1} parent=1 // pred_region
      %s16 = ssub.s32 32, 32
      %17 = vsyncadd [#allocation3], %s16
      %s19 = sshll.u32 [#allocation2], 4
      %s20 = int_to_ptr.vmem [resolvable:$true] %s19
      %22 = dma.hbm_to_vmem [thread:$0]  %s0, 32, %s20, [#allocation3]
    $region5: #{tpu_custom_call.1} parent=1 // pred_fallthru
      _
    // Predicated region
    $region6: #{tpu_custom_call.1} parent=1 // pred_check
      _
    $region7: #{tpu_custom_call.1} parent=1 // pred_check_branch
      %24 = sbr.rel (0) target = $region9
    $region8: #{tpu_custom_call.1} parent=1 // pred_region
      %s26 = ssub.s32 512, 512
      %27 = vsyncadd [#allocation6], %s26
      %s28 = sshll.u32 [#allocation5], 4
      %s29 = int_to_ptr.vmem [resolvable:$true] %s28
      %34 = dma.hbm_to_vmem [thread:$0]  %s1, 512, %s29, [#allocation6], 128, 128, 8
    $region9: #{tpu_custom_call.1} parent=1 // pred_fallthru
      _
    // Predicated region
    $region10: #{tpu_custom_call.1} parent=1 // pred_check
      _
    $region11: #{tpu_custom_call.1} parent=1 // pred_check_branch
      %36 = sbr.rel (0) target = $region13
    $region12: #{tpu_custom_call.1} parent=1 // pred_region
      _
    $region13: #{tpu_custom_call.1} parent=1 // pred_fallthru
      _
    // Predicated region
    $region14: #{tpu_custom_call.1} parent=1 // pred_check
      _
    $region15: #{tpu_custom_call.1} parent=1 // pred_check_branch
      %38 = sbr.rel (0) target = $region17
    $region16: #{tpu_custom_call.1} parent=1 // pred_region
      %s40 = ssub.s32 1024, 1024
      %41 = vsyncadd [#allocation6], %s40
      %s42 = sshll.u32 [#allocation7], 4
      %s43 = int_to_ptr.vmem [resolvable:$true] %s42
      %48 = dma.hbm_to_vmem [thread:$0]  %s3, 1024, %s43, [#allocation6], 128, 128, 8
    $region17: #{tpu_custom_call.1} parent=1 // pred_fallthru
      _
    // Predicated region
    $region18: #{tpu_custom_call.1} parent=1 // pred_check
      _
    $region19: #{tpu_custom_call.1} parent=1 // pred_check_branch
      %50 = sbr.rel (0) target = $region21
    $region20: #{tpu_custom_call.1} parent=1 // pred_region
      _
    $region21: #{tpu_custom_call.1} parent=1 // pred_fallthru
      _
    // Predicated region
    $region22: #{tpu_custom_call.1} parent=1 // pred_check
      _
    $region23: #{tpu_custom_call.1} parent=1 // pred_check_branch
      %52 = sbr.rel (0) target = $region25
    $region24: #{tpu_custom_call.1} parent=1 // pred_region
      %53 = dma.done [#allocation3], 32
    $region25: #{tpu_custom_call.1} parent=1 // pred_fallthru
      _
    // Predicated region
    $region26: #{tpu_custom_call.1} parent=1 // pred_check
      _
    $region27: #{tpu_custom_call.1} parent=1 // pred_check_branch
      %55 = sbr.rel (0) target = $region29
    $region28: #{tpu_custom_call.1} parent=1 // pred_region
      %56 = dma.done [#allocation6], 512
    $region29: #{tpu_custom_call.1} parent=1 // pred_fallthru
      _
    // Predicated region
    $region30: #{tpu_custom_call.1} parent=1 // pred_check
      _
    $region31: #{tpu_custom_call.1} parent=1 // pred_check_branch
      %58 = sbr.rel (0) target = $region33
    $region32: #{tpu_custom_call.1} parent=1 // pred_region
      %59 = dma.done [#allocation6], 1024
    $region33: #{tpu_custom_call.1} parent=1 // pred_fallthru
      _
    %v60 = vld [vmem:[#allocation2] sm:$0x3]
    %v61 = vld [vmem:[#allocation5] sm:$0xff]
    %v62 = vld [vmem:[#allocation5 + $0x8] sm:$0xff]
    %v63 = vld [vmem:[#allocation5 + $0x10] sm:$0xff]
    %v64 = vld [vmem:[#allocation5 + $0x18] sm:$0xff]
    %v65 = vld [vmem:[%s2] sm:$0x1]
    %v67 = vlaneseq
    %v68 = vshrl.u32 %v67, 7
    %v69 = vsub.s32 0, %v68
    %v70 = vrot.slane %v65, %v69
    %vm72 = vcmask 261120
    %v74 = vsel %vm72, %v60, 0
    %76 = vmatprep.subr.mxu0 0.0
    %77 = vmatpush1.msra.mxu0 0.0
    %78 = vmatprep.subr.mxu0 0.0
    %79 = vmatpush1.msra.mxu0 0.0
    %80 = vmatprep.subr.mxu0 0.0
    %81 = vmatpush1.msra.mxu0 0.0
    %82 = vmatprep.subr.mxu0 0.0
    %83 = vmatpush1.msra.mxu0 0.0
    %84 = vmatprep.subr.mxu0 0.0
    %85 = vmatpush1.msra.mxu0 0.0
    %86 = vmatprep.subr.mxu0 0.0
    %87 = vmatpush1.msra.mxu0 0.0
    %88 = vmatprep.subr.mxu0 0.0
    %89 = vmatpush1.msra.mxu0 0.0
    %90 = vmatprep.subr.mxu0 0.0
    %91 = vmatpush1.msra.mxu0 0.0
    %92 = vmatprep.subr.mxu0 0.0
    %93 = vmatpush1.msra.mxu0 0.0
    %94 = vmatprep.subr.mxu0 0.0
    %95 = vmatpush1.msra.mxu0 0.0
    %96 = vmatprep.subr.mxu0 0.0
    %97 = vmatpush1.msra.mxu0 0.0
    %98 = vmatprep.subr.mxu0 0.0
    %99 = vmatpush1.msra.mxu0 0.0
    %100 = vmatprep.subr.mxu0 0.0
    %101 = vmatpush1.msra.mxu0 %v64
    %102 = vmatprep.subr.mxu0 0.0
    %103 = vmatpush1.msra.mxu0 %v63
    %104 = vmatprep.subr.mxu0 0.0
    %105 = vmatpush1.msra.mxu0 %v62
    %106 = vmatprep.subr.mxu0 0.0
    %107 = vmatpush1.msra.mxu0 %v61
    %108 = vmatprep.subr.mxu0 0.0
    %109 = vmatpush2.msra.mxu0 0.0
    %110 = vmatprep.subr.mxu0 0.0
    %111 = vmatpush2.msra.mxu0 0.0
    %112 = vmatprep.subr.mxu0 0.0
    %113 = vmatpush2.msra.mxu0 0.0
    %114 = vmatprep.subr.mxu0 0.0
    %115 = vmatpush2.msra.mxu0 0.0
    %116 = vmatprep.subr.mxu0 0.0
    %117 = vmatpush2.msra.mxu0 0.0
    %118 = vmatprep.subr.mxu0 0.0
    %119 = vmatpush2.msra.mxu0 0.0
    %120 = vmatprep.subr.mxu0 0.0
    %121 = vmatpush2.msra.mxu0 0.0
    %122 = vmatprep.subr.mxu0 0.0
    %123 = vmatpush2.msra.mxu0 0.0
    %124 = vmatprep.subr.mxu0 0.0
    %125 = vmatpush2.msra.mxu0 0.0
    %126 = vmatprep.subr.mxu0 0.0
    %127 = vmatpush2.msra.mxu0 0.0
    %128 = vmatprep.subr.mxu0 0.0
    %129 = vmatpush2.msra.mxu0 0.0
    %130 = vmatprep.subr.mxu0 0.0
    %131 = vmatpush2.msra.mxu0 0.0
    %132 = vmatprep.subr.mxu0 0.0
    %133 = vmatpush2.msra.mxu0 0.0
    %134 = vmatprep.subr.mxu0 0.0
    %135 = vmatpush2.msra.mxu0 0.0
    %136 = vmatprep.subr.mxu0 0.0
    %137 = vmatpush2.msra.mxu0 0.0
    %138 = vmatprep.subr.mxu0 0.0
    %139 = vmatpush2.msra.mxu0 0.0
    %140 = vmatprep.mubr.f32.mxu0 0.0
    %141 = vmatmul.mubr.f32.gmra.mxu0 %v74
    %v142 = vpop.f32.mrf.mxu0
    %v143 = vadd.f32 %v70, %v142
    %v144 = vpop.f32.mrf.mxu0
    %145 = vdwg.mxu0
    %v146 = vmax.f32 %v143, 0.0
    %v147 = vld [vmem:[#allocation7] sm:$0xff]
    %v148 = vld [vmem:[#allocation7 + $0x8] sm:$0xff]
    %v149 = vld [vmem:[#allocation7 + $0x10] sm:$0xff]
    %v150 = vld [vmem:[#allocation7 + $0x18] sm:$0xff]
    %v151 = vld [vmem:[#allocation7 + $0x20] sm:$0xff]
    %v152 = vld [vmem:[#allocation7 + $0x28] sm:$0xff]
    %v153 = vld [vmem:[#allocation7 + $0x30] sm:$0xff]
    %v154 = vld [vmem:[#allocation7 + $0x38] sm:$0xff]
    %v155 = vld [vmem:[%s4] sm:$0x1]
    %v157 = vlaneseq
    %v158 = vshrl.u32 %v157, 7
    %v159 = vsub.s32 0, %v158
    %v160 = vrot.slane %v155, %v159
    %vm162 = vcmask 523264
    %v164 = vsel %vm162, %v146, 0
    %166 = vmatprep.subr.mxu0 0.0
    %167 = vmatpush1.msra.mxu0 0.0
    %168 = vmatprep.subr.mxu0 0.0
    %169 = vmatpush1.msra.mxu0 0.0
    %170 = vmatprep.subr.mxu0 0.0
    %171 = vmatpush1.msra.mxu0 0.0
    %172 = vmatprep.subr.mxu0 0.0
    %173 = vmatpush1.msra.mxu0 0.0
    %174 = vmatprep.subr.mxu0 0.0
    %175 = vmatpush1.msra.mxu0 0.0
    %176 = vmatprep.subr.mxu0 0.0
    %177 = vmatpush1.msra.mxu0 0.0
    %178 = vmatprep.subr.mxu0 0.0
    %179 = vmatpush1.msra.mxu0 0.0
    %180 = vmatprep.subr.mxu0 0.0
    %181 = vmatpush1.msra.mxu0 0.0
    %182 = vmatprep.subr.mxu0 0.0
    %183 = vmatpush1.msra.mxu0 %v154
    %184 = vmatprep.subr.mxu0 0.0
    %185 = vmatpush1.msra.mxu0 %v153
    %186 = vmatprep.subr.mxu0 0.0
    %187 = vmatpush1.msra.mxu0 %v152
    %188 = vmatprep.subr.mxu0 0.0
    %189 = vmatpush1.msra.mxu0 %v151
    %190 = vmatprep.subr.mxu0 0.0
    %191 = vmatpush1.msra.mxu0 %v150
    %192 = vmatprep.subr.mxu0 0.0
    %193 = vmatpush1.msra.mxu0 %v149
    %194 = vmatprep.subr.mxu0 0.0
    %195 = vmatpush1.msra.mxu0 %v148
    %196 = vmatprep.subr.mxu0 0.0
    %197 = vmatpush1.msra.mxu0 %v147
    %198 = vmatprep.subr.mxu0 0.0
    %199 = vmatpush2.msra.mxu0 0.0
    %200 = vmatprep.subr.mxu0 0.0
    %201 = vmatpush2.msra.mxu0 0.0
    %202 = vmatprep.subr.mxu0 0.0
    %203 = vmatpush2.msra.mxu0 0.0
    %204 = vmatprep.subr.mxu0 0.0
    %205 = vmatpush2.msra.mxu0 0.0
    %206 = vmatprep.subr.mxu0 0.0
    %207 = vmatpush2.msra.mxu0 0.0
    %208 = vmatprep.subr.mxu0 0.0
    %209 = vmatpush2.msra.mxu0 0.0
    %210 = vmatprep.subr.mxu0 0.0
    %211 = vmatpush2.msra.mxu0 0.0
    %212 = vmatprep.subr.mxu0 0.0
    %213 = vmatpush2.msra.mxu0 0.0
    %214 = vmatprep.subr.mxu0 0.0
    %215 = vmatpush2.msra.mxu0 0.0
    %216 = vmatprep.subr.mxu0 0.0
    %217 = vmatpush2.msra.mxu0 0.0
    %218 = vmatprep.subr.mxu0 0.0
    %219 = vmatpush2.msra.mxu0 0.0
    %220 = vmatprep.subr.mxu0 0.0
    %221 = vmatpush2.msra.mxu0 0.0
    %222 = vmatprep.subr.mxu0 0.0
    %223 = vmatpush2.msra.mxu0 0.0
    %224 = vmatprep.subr.mxu0 0.0
    %225 = vmatpush2.msra.mxu0 0.0
    %226 = vmatprep.subr.mxu0 0.0
    %227 = vmatpush2.msra.mxu0 0.0
    %228 = vmatprep.subr.mxu0 0.0
    %229 = vmatpush2.msra.mxu0 0.0
    %230 = vmatprep.mubr.f32.mxu0 0.0
    %231 = vmatmul.mubr.f32.gmra.mxu0 %v164
    %v232 = vpop.f32.mrf.mxu0
    %v233 = vadd.f32 %v160, %v232
    %v234 = vpop.f32.mrf.mxu0
    %235 = vdwg.mxu0
    %236 = vst [vmem:[#allocation8] sm:$0x3] %v233
    // Predicated region
    $region34: #{tpu_custom_call.1} parent=1 // pred_check
      _
    $region35: #{tpu_custom_call.1} parent=1 // pred_check_branch
      %238 = sbr.rel (0) target = $region37
    $region36: #{tpu_custom_call.1} parent=1 // pred_region
      %s240 = ssub.s32 32, 32
      %241 = vsyncadd [#allocation4], %s240
      %s243 = sshll.u32 [#allocation8], 4
      %s244 = int_to_ptr.vmem [resolvable:$true] %s243
      %246 = dma.vmem_to_hbm [thread:$0]  %s244, 32, %s5, [#allocation4]
    $region37: #{tpu_custom_call.1} parent=1 // pred_fallthru
      _
    // Predicated region
    $region38: #{tpu_custom_call.1} parent=1 // pred_check
      _
    $region39: #{tpu_custom_call.1} parent=1 // pred_check_branch
      %248 = sbr.rel (0) target = $region41
    $region40: #{tpu_custom_call.1} parent=1 // pred_region
      %249 = dma.done [#allocation4], 32
    $region41: #{tpu_custom_call.1} parent=1 // pred_fallthru
      _
    %250 = vsyncpa [#allocation3], 1
    %251 = vsyncpa [#allocation6], 1
    %252 = vsyncpa [#allocation4], 1

</llo_original>
